<compile_context>
chip_gen: v5e
topology: v5e:2x2
jax: 0.10.0
libtpu: 0.0.40
codegen_flags: <defaults>
</compile_context>

<pallas_src>
import numpy as np
import jax
import jax.numpy as jnp
from jax.experimental import pallas as pl
from jax.experimental.pallas import tpu as pltpu


def _make_positional_weight(d_model: int, max_len: int) -> jnp.ndarray:
    """Exactly reproduces the PyTorch _initialize_weight loops (1-indexed pos/i,
    exponent (2*i)//2 / d_model == i / d_model, sin for even i, cos for odd i)."""
    pos = np.arange(1, max_len + 1, dtype=np.float64)[:, None]      # (max_len, 1)
    i = np.arange(1, d_model + 1, dtype=np.int64)[None, :]          # (1, d_model)
    w = pos / np.power(10000.0, i.astype(np.float64) / d_model)
    pe = np.where(i % 2 == 0, np.sin(w), np.cos(w))
    return jnp.asarray(pe, dtype=jnp.float32)


def _add_pe_kernel(x_ref, pe_ref, o_ref):
    # x_ref/o_ref: (TB, TC); pe_ref: (1, TC) -> cheap sublane broadcast on the VPU.
    o_ref[...] = x_ref[...] + pe_ref[...]


def _choose_tiles(B, N, itemsize, target_block_bytes):
    """Pick (TB, TC): TC a multiple of 128 dividing N (lane-dense), block ~target bytes."""
    if N % 128 == 0:
        max_tc = max(128, (target_block_bytes // (min(B, 8) * itemsize)) // 128 * 128)
        tc = min(N, max_tc)
        while N % tc != 0:
            tc -= 128
    else:
        tc = N  # full last dim satisfies the layout rule even if not 128-aligned
    row_bytes = tc * itemsize
    tb = min(B, max(1, target_block_bytes // row_bytes))
    if tb < B:
        tb = min(B, max(8, (tb // 8) * 8))  # keep sublane tile a multiple of 8
    return tb, tc


def add_positional_encoding(x: jnp.ndarray, pe_full: jnp.ndarray,
                            *, target_block_bytes: int = 2 * 1024 * 1024) -> jnp.ndarray:
    """x: (B, S, D); pe_full: (max_len, D). Returns x + pe_full[:S][None, :, :]."""
    B, S, D = x.shape
    N = S * D
    itemsize = jnp.dtype(x.dtype).itemsize

    # Host-side prep: slice + cast pe once, flatten to a lane-dense 2-D layout.
    pe2 = pe_full[:S, :].astype(x.dtype).reshape(1, N)   # (1, S*D)
    x2 = x.reshape(B, N)                                  # (B, S*D)

    tb, tc = _choose_tiles(B, N, itemsize, target_block_bytes)
    grid_cols = pl.cdiv(N, tc)
    grid_rows = pl.cdiv(B, tb)

    out2 = pl.pallas_call(
        _add_pe_kernel,
        out_shape=jax.ShapeDtypeStruct((B, N), x.dtype),
        grid_spec=pltpu.PrefetchScalarGridSpec(
            num_scalar_prefetch=0,
            # Column (seq*feature) tiles outermost, batch tiles innermost: the pe
            # block index depends only on the column tile, so pe stays resident
            # in VMEM across the whole batch loop (one HBM read of pe total).
            grid=(grid_cols, grid_rows),
            in_specs=[
                pl.BlockSpec((tb, tc), lambda c, r: (r, c)),   # x
                pl.BlockSpec((1, tc), lambda c, r: (0, c)),    # pe (resident over r)
            ],
            out_specs=pl.BlockSpec((tb, tc), lambda c, r: (r, c)),
        ),
        compiler_params=pltpu.CompilerParams(
            dimension_semantics=("parallel", "parallel"),
            vmem_limit_bytes=32 * 1024 * 1024,
        ),
        # x is not needed past this op: let the output reuse its buffer.
        input_output_aliases={0: 0},
        cost_estimate=pl.CostEstimate(
            flops=B * N,
            transcendentals=0,
            bytes_accessed=(2 * B * N + N) * itemsize,
        ),
    )(x2, pe2)

    return out2.reshape(B, S, D)


if __name__ == "__main__":
    d_model = 32
    max_len = 16
    batch = 2
    seq = 8

    pe_full = _make_positional_weight(d_model, max_len)

    key = jax.random.PRNGKey(0)
    x = jax.random.normal(key, (batch, seq, d_model), dtype=jnp.float32)

    # Reference (plain JAX), computed up-front.
    ref = x + pe_full[:seq, :].astype(x.dtype)[None, :, :]

    out = add_positional_encoding(x, pe_full)
    out = jax.block_until_ready(out)

    np.testing.assert_allclose(np.asarray(out), np.asarray(ref), rtol=1e-6, atol=1e-6)
    print("KERNEL_OK")
</pallas_src>

<mosaic_0001>
module attributes {stable_mosaic.version = 11 : i64} {
  func.func @_add_pe_kernel(%arg0: i32, %arg1: i32, %arg2: memref<2x256xf32, #tpu.memory_space<vmem>>, %arg3: memref<1x256xf32, #tpu.memory_space<vmem>>, %arg4: memref<2x256xf32, #tpu.memory_space<vmem>>) attributes {dimension_semantics = [#tpu.dimension_semantics<parallel>, #tpu.dimension_semantics<parallel>], iteration_bounds = array<i64: 1, 1>, scalar_prefetch = 0 : i64, scratch_operands = 0 : i64, tpu.core_type = #tpu.core_type<tc>, window_params = [{transform_indices = @transform_0, window_bounds = array<i64: 2, 256>}, {transform_indices = @transform_1, window_bounds = array<i64: 1, 256>}, {transform_indices = @transform_2, window_bounds = array<i64: 2, 256>}]} {
    %c0 = arith.constant 0 : index
    %c0_0 = arith.constant 0 : index
    %0 = vector.load %arg2[%c0, %c0_0] : memref<2x256xf32, #tpu.memory_space<vmem>>, vector<2x256xf32>
    %c0_1 = arith.constant 0 : index
    %c0_2 = arith.constant 0 : index
    %1 = vector.load %arg3[%c0_1, %c0_2] : memref<1x256xf32, #tpu.memory_space<vmem>>, vector<1x256xf32>
    %2 = vector.broadcast %1 : vector<1x256xf32> to vector<2x256xf32>
    %3 = arith.addf %0, %2 : vector<2x256xf32>
    %c0_3 = arith.constant 0 : index
    %c0_4 = arith.constant 0 : index
    %4 = vector.load %arg4[%c0_3, %c0_4] : memref<2x256xf32, #tpu.memory_space<vmem>>, vector<2x256xf32>
    tpu.vector_store %arg4[%c0_3, %c0_4], %3 {strides = array<i32>} : memref<2x256xf32, #tpu.memory_space<vmem>>, vector<2x256xf32>,
    return
  }
  func.func @transform_0(%arg0: i32, %arg1: i32) -> (i32, i32) {
    %c0_i32 = arith.constant 0 : i32
    return %arg1, %arg0 : i32, i32
  }
  func.func @transform_1(%arg0: i32, %arg1: i32) -> (i32, i32) {
    %c0_i32 = arith.constant 0 : i32
    %c0_i32_0 = arith.constant 0 : i32
    return %c0_i32, %arg0 : i32, i32
  }
  func.func @transform_2(%arg0: i32, %arg1: i32) -> (i32, i32) {
    %c0_i32 = arith.constant 0 : i32
    return %arg1, %arg0 : i32, i32
  }
}

</mosaic_0001>

<llo_original>
// kernel: tpu_custom_call.1
$region0: #{tpu_custom_call.1}
  #allocation0 [shape = 'u32[]', space=smem, size = 0x4, offset = 0x4, fixed_abs, tag = 'smem constant byte address 0x4 - core index']
  #allocation1 [shape = 'u32[72,128]{1,0:T(1,128)}', space=vmem, size = 0x9000, scoped, tag = 'internal scratch']
  %s0 = inlined_call_operand.hbm [shape: f32[2,256], index: 0, kind: input, shape index: {}, may-alias: {0,2}]
  %s1 = inlined_call_operand.vmem [shape: f32[1,256], index: 1, kind: input, shape index: {}]
  %s2 = inlined_call_operand.hbm [shape: f32[2,256], index: 2, kind: output, shape index: {}, may-alias: {0,2}]
  %s3 = sld [smem:[#allocation0]]
  $region22: #{tpu_custom_call.1} parent=0
    _
  %s5 = ssub.s32 1, %s3
  %s6 = scalar_select 0, %s5, %s3
  $region1: #{tpu_custom_call.1} parent=0
    #allocation2 [shape = 'u8[2048]{0}', space=vmem, size = 0x800, scoped, tag = 'input window, operand 0, single buffered']
    #allocation3 [shape = 's32[1]{0}', space=sflag, size = 0x4, scoped, tag = 'scoped memory for tpu_custom_call.1']
    #allocation4 [shape = 's32[1]{0}', space=sflag, size = 0x4, scoped, tag = 'scoped memory for tpu_custom_call.1']
    #allocation5 [shape = 'u8[2048]{0}', space=vmem, size = 0x800, scoped, tag = 'output window, operand 0, single buffered']
    %7 = vsyncpa [#allocation3], 0
    %8 = vsyncpa [#allocation4], 0
    // Predicated region
    $region2: #{tpu_custom_call.1} parent=1 // pred_check
      _
    $region3: #{tpu_custom_call.1} parent=1 // pred_check_branch
      %10 = sbr.rel (0) target = $region5
    $region4: #{tpu_custom_call.1} parent=1 // pred_region
      %12 = vsyncadd [#allocation3], 0
      %s14 = sshll.u32 %s0, 4
      %s15 = int_to_ptr.hbm [resolvable:$true] %s14
      %s16 = sshll.u32 [#allocation2], 4
      %s17 = int_to_ptr.vmem [resolvable:$true] %s16
      %19 = dma.hbm_to_vmem [thread:$0]  %s15, 64, %s17, [#allocation3]
    $region5: #{tpu_custom_call.1} parent=1 // pred_fallthru
      _
    // Predicated region
    $region6: #{tpu_custom_call.1} parent=1 // pred_check
      _
    $region7: #{tpu_custom_call.1} parent=1 // pred_check_branch
      %21 = sbr.rel (0) target = $region9
    $region8: #{tpu_custom_call.1} parent=1 // pred_region
      _
    $region9: #{tpu_custom_call.1} parent=1 // pred_fallthru
      _
    // Predicated region
    $region10: #{tpu_custom_call.1} parent=1 // pred_check
      _
    $region11: #{tpu_custom_call.1} parent=1 // pred_check_branch
      %23 = sbr.rel (0) target = $region13
    $region12: #{tpu_custom_call.1} parent=1 // pred_region
      %25 = dma.done [#allocation3], 64
    $region13: #{tpu_custom_call.1} parent=1 // pred_fallthru
      _
    %v26 = vld [vmem:[#allocation2] sm:$0xf]
    %v27 = vld [vmem:[%s1] sm:$0x3]
    %v29 = vperm.slane %v27, 0
    %v30 = vperm.slane %v27, 1
    %v31 = vrot.slane %v30, 6
    %vm32 = vcmask 1041408
    %v33 = vsel %vm32, %v29, %v31
    %v35 = vadd.f32 %v26, %v33
    %36 = vst [vmem:[#allocation5] sm:$0xf] %v35
    // Predicated region
    $region14: #{tpu_custom_call.1} parent=1 // pred_check
      _
    $region15: #{tpu_custom_call.1} parent=1 // pred_check_branch
      %38 = sbr.rel (0) target = $region17
    $region16: #{tpu_custom_call.1} parent=1 // pred_region
      %40 = vsyncadd [#allocation4], 0
      %s42 = sshll.u32 [#allocation5], 4
      %s43 = int_to_ptr.vmem [resolvable:$true] %s42
      %s44 = sshll.u32 %s2, 4
      %s45 = int_to_ptr.hbm [resolvable:$true] %s44
      %47 = dma.vmem_to_hbm [thread:$0]  %s43, 64, %s45, [#allocation4]
    $region17: #{tpu_custom_call.1} parent=1 // pred_fallthru
      _
    // Predicated region
    $region18: #{tpu_custom_call.1} parent=1 // pred_check
      _
    $region19: #{tpu_custom_call.1} parent=1 // pred_check_branch
      %49 = sbr.rel (0) target = $region21
    $region20: #{tpu_custom_call.1} parent=1 // pred_region
      %51 = dma.done [#allocation4], 64
    $region21: #{tpu_custom_call.1} parent=1 // pred_fallthru
      _
    %52 = vsyncpa [#allocation3], 1
    %53 = vsyncpa [#allocation4], 1

</llo_original>
